<compile_context>
chip_gen: v5e
topology: v5e:2x2
jax: 0.10.0
libtpu: 0.0.40
codegen_flags: <defaults>
</compile_context>

<pallas_src>
import functools

import jax
import jax.numpy as jnp
from jax.experimental import pallas as pl
from jax.experimental.pallas import tpu as pltpu


# --------------------------------------------------------------------------
# Phase 1: depthwise dilated conv (bf16 out) + per-channel sum / sum-of-squares
# --------------------------------------------------------------------------
def _dw_stats_kernel(x_ref, dww_ref, acc_ref, stats_ref, sum_sc,
                     *, K, dilation, stride):
    b = pl.program_id(1)

    @pl.when(b == 0)
    def _init():
        sum_sc[...] = jnp.zeros_like(sum_sc)

    t_out = acc_ref.shape[-1]

    # Depthwise dilated conv: one static-offset ref slice per tap, f32 VPU MACs.
    acc = jnp.zeros(acc_ref.shape, jnp.float32)            # (1, c_blk, T_out)
    for k in range(K):                                      # K static & small
        start = k * dilation
        if stride == 1:
            xs = x_ref[:, :, pl.ds(start, t_out)]
        else:
            # TODO(synk): for stride > 1 a contiguous load + decimate may lower
            # better than a strided lane read; verify with a bundle dump.
            xs = x_ref[:, :, pl.ds(start, t_out, stride=stride)]
        w_k = dww_ref[:, k:k + 1][None]                     # (1, c_blk, 1)
        acc = acc + xs.astype(jnp.float32) * w_k.astype(jnp.float32)

    # Store the depthwise activation in bf16 (half the intermediate HBM
    # traffic, native MXU operand dtype for phase 2); stats stay in f32 and
    # are computed from the f32 accumulator.
    acc_ref[...] = acc.astype(acc_ref.dtype)

    a2 = acc[0]                                             # (c_blk, T_out) f32
    ssum = jnp.sum(a2, axis=1, keepdims=True)               # (c_blk, 1)
    ssq = jnp.sum(a2 * a2, axis=1, keepdims=True)           # (c_blk, 1)
    sum_sc[:, 0:1] = sum_sc[:, 0:1] + ssum
    sum_sc[:, 1:2] = sum_sc[:, 1:2] + ssq

    @pl.when(b == pl.num_programs(1) - 1)
    def _fin():
        stats_ref[...] = sum_sc[...]


# --------------------------------------------------------------------------
# Phase 2: folded-BN pointwise conv = one bf16 MXU matmul per (batch, T-tile)
# --------------------------------------------------------------------------
def _pw_kernel(w_ref, bias_ref, acc_ref, out_ref):
    # BN already folded into w/bias (done once in the wrapper, not per tile).
    y = jnp.dot(w_ref[...], acc_ref[0], preferred_element_type=jnp.float32)
    out_ref[0] = (y + bias_ref[...]).astype(out_ref.dtype)


# --------------------------------------------------------------------------
# Tiling helpers (generation-aware VMEM budget)
# --------------------------------------------------------------------------
def _vmem_limit_bytes():
    phys = 64 * 1024 * 1024            # conservative default = v7x physical
    try:
        info = pltpu.get_tpu_info()
        phys = int(getattr(info, "vmem_capacity_bytes", phys))
    except Exception:
        pass
    # ~75% of physical: ~96 MiB on v5e/v6e (128 MiB), ~48 MiB on v7x (64 MiB).
    return min((phys * 3) // 4, 110 * 1024 * 1024)


def _pick_c_blk(C_in, T, T_out, x_bytes, acc_bytes, budget):
    cands = [C_in] + [c for c in (512, 256, 128, 64, 32, 16, 8)
                      if c < C_in and C_in % c == 0]

    def fits(c):
        # double-buffered x block + double-buffered bf16 acc block
        return 2 * c * T * x_bytes + 2 * c * T_out * acc_bytes <= budget

    fitting = [c for c in cands if fits(c)]
    if not fitting:
        # TODO(synk): for very long T even c_blk=8 overflows VMEM; a halo'd
        # T tiling of phase 1 would be needed.
        return cands[-1]
    # Prefer >= 2 channel blocks so both v7x TensorCores get work on the
    # parallel axis (near-neutral on 1-TC v5e/v6e: at most 2x the step count).
    for c in fitting:
        if C_in // c >= 2:
            return c
    return fitting[0]


def _pick_tile_t(T_out, C_in, C_out, out_bytes, budget):
    for t in (8192, 4096, 2048, 1024, 512, 256, 128):
        if T_out % t == 0 and (2 * C_in * t * 2 + 2 * C_out * t * out_bytes
                               <= budget):
            return t
    return T_out        # full-dim fallback keeps the BlockSpec legal


# --------------------------------------------------------------------------
# Wrapper
# --------------------------------------------------------------------------
def ds_dilated_conv1d(x, dw_w, dw_b, gamma, beta, pw_w, pw_b,
                      *, kernel_size, dilation=1, stride=1, eps=1e-5):
    """x: (B, C_in, T); dw_w: (C_in, 1, K); pw_w: (C_out, C_in, 1)."""
    del dw_b  # per-channel constant before training-mode BN cancels exactly
    B, C_in, T = x.shape
    C_out = pw_w.shape[0]
    K = kernel_size
    T_out = (T - dilation * (K - 1) - 1) // stride + 1
    assert T_out >= 1

    dww = dw_w[:, 0, :]                       # (C_in, K)
    pww = pw_w[:, :, 0].astype(jnp.float32)   # (C_out, C_in)

    acc_dtype = jnp.bfloat16                  # intermediate lives in bf16
    vmem_limit = _vmem_limit_bytes()
    tile_budget = int(vmem_limit * 0.8)

    c_blk = _pick_c_blk(C_in, T, T_out, x.dtype.itemsize,
                        jnp.dtype(acc_dtype).itemsize, tile_budget)
    n_cb = C_in // c_blk
    tile_t = _pick_tile_t(T_out, C_in, C_out, x.dtype.itemsize, tile_budget)
    n_tt = T_out // tile_t

    # ---- Phase 1: depthwise conv (bf16) + per-channel sum / sumsq (f32) ----
    dw_kernel = functools.partial(_dw_stats_kernel,
                                  K=K, dilation=dilation, stride=stride)
    acc, stats = pl.pallas_call(
        dw_kernel,
        out_shape=(jax.ShapeDtypeStruct((B, C_in, T_out), acc_dtype),
                   jax.ShapeDtypeStruct((C_in, 2), jnp.float32)),
        grid=(n_cb, B),
        in_specs=[pl.BlockSpec((1, c_blk, T), lambda cb, b: (b, cb, 0)),
                  pl.BlockSpec((c_blk, K), lambda cb, b: (cb, 0))],
        out_specs=(pl.BlockSpec((1, c_blk, T_out), lambda cb, b: (b, cb, 0)),
                   pl.BlockSpec((c_blk, 2), lambda cb, b: (cb, 0))),
        scratch_shapes=[pltpu.VMEM((c_blk, 2), jnp.float32)],
        compiler_params=pltpu.CompilerParams(
            dimension_semantics=("parallel", "arbitrary"),
            vmem_limit_bytes=vmem_limit),
    )(x, dww)

    # ---- BN fold (tiny, plain jnp; computed ONCE instead of per tile) ----
    inv_n = 1.0 / float(B * T_out)
    mean = stats[:, 0] * inv_n                                  # (C_in,)
    var = jnp.maximum(stats[:, 1] * inv_n - mean * mean, 0.0)   # biased, clamped
    scale = gamma.astype(jnp.float32) * jax.lax.rsqrt(var + eps)
    shift = beta.astype(jnp.float32) - mean * scale
    w_fold = (pww * scale[None, :]).astype(jnp.bfloat16)        # (C_out, C_in)
    b_fold = (pww @ shift + pw_b.astype(jnp.float32)).reshape(C_out, 1)

    # ---- Phase 2: pointwise matmul (bf16 MXU), lane-dense output tiles ----
    out = pl.pallas_call(
        _pw_kernel,
        out_shape=jax.ShapeDtypeStruct((B, C_out, T_out), x.dtype),
        grid=(B, n_tt),
        in_specs=[pl.BlockSpec((C_out, C_in), lambda b, j: (0, 0)),
                  pl.BlockSpec((C_out, 1), lambda b, j: (0, 0)),
                  pl.BlockSpec((1, C_in, tile_t), lambda b, j: (b, 0, j))],
        out_specs=pl.BlockSpec((1, C_out, tile_t), lambda b, j: (b, 0, j)),
        compiler_params=pltpu.CompilerParams(
            dimension_semantics=("parallel", "parallel"),
            vmem_limit_bytes=vmem_limit),
    )(w_fold, b_fold, acc)
    return out


# --------------------------------------------------------------------------
# Pure-JAX reference mirroring the PyTorch forward (training-mode BN)
# --------------------------------------------------------------------------
def _reference(x, dw_w, dw_b, gamma, beta, pw_w, pw_b,
               kernel_size, dilation, stride, eps=1e-5):
    B, C, T = x.shape
    T_out = (T - dilation * (kernel_size - 1) - 1) // stride + 1
    out = jnp.zeros((B, C, T_out), jnp.float32)
    for k in range(kernel_size):
        start = k * dilation
        xs = x[:, :, start:start + (T_out - 1) * stride + 1:stride]
        out = out + xs * dw_w[:, 0, k][None, :, None]
    out = out + dw_b[None, :, None]
    mean = out.mean(axis=(0, 2), keepdims=True)
    var = ((out - mean) ** 2).mean(axis=(0, 2), keepdims=True)
    y = (out - mean) / jnp.sqrt(var + eps)
    y = y * gamma[None, :, None] + beta[None, :, None]
    return jnp.einsum("oc,bct->bot", pw_w[:, :, 0], y) + pw_b[None, :, None]


if __name__ == "__main__":
    B, C_in, C_out, T = 2, 4, 8, 16
    K, dilation, stride = 3, 2, 1

    key = jax.random.PRNGKey(0)
    k_x, k_dw, k_db, k_g, k_b, k_pw, k_pb = jax.random.split(key, 7)

    x = jax.random.normal(k_x, (B, C_in, T), dtype=jnp.float32)
    dw_w = 0.3 * jax.random.normal(k_dw, (C_in, 1, K), dtype=jnp.float32)   # depthwise weight
    dw_b = 0.1 * jax.random.normal(k_db, (C_in,), dtype=jnp.float32)        # depthwise bias
    gamma = 1.0 + 0.1 * jax.random.normal(k_g, (C_in,), dtype=jnp.float32)  # BN weight
    beta = 0.1 * jax.random.normal(k_b, (C_in,), dtype=jnp.float32)         # BN bias
    pw_w = 0.3 * jax.random.normal(k_pw, (C_out, C_in, 1), dtype=jnp.float32)  # pointwise weight
    pw_b = 0.1 * jax.random.normal(k_pb, (C_out,), dtype=jnp.float32)          # pointwise bias

    out = ds_dilated_conv1d(x, dw_w, dw_b, gamma, beta, pw_w, pw_b,
                            kernel_size=K, dilation=dilation, stride=stride)
    out = jax.block_until_ready(out)

    ref = _reference(x, dw_w, dw_b, gamma, beta, pw_w, pw_b, K, dilation, stride)
    assert out.shape == ref.shape, (out.shape, ref.shape)
    # Tolerance relaxed for the bf16 depthwise intermediate / bf16 MXU path.
    assert jnp.allclose(out, ref, atol=2e-2, rtol=2e-2), float(jnp.abs(out - ref).max())

    print("KERNEL_OK")
</pallas_src>

<mosaic_0001>
module attributes {stable_mosaic.version = 11 : i64} {
  func.func @_dw_stats_kernel(%arg0: i32, %arg1: i32, %arg2: memref<1x4x16xf32, #tpu.memory_space<vmem>>, %arg3: memref<4x3xf32, #tpu.memory_space<vmem>>, %arg4: memref<1x4x12xbf16, #tpu.memory_space<vmem>>, %arg5: memref<4x2xf32, #tpu.memory_space<vmem>>, %arg6: memref<4x2xf32, #tpu.memory_space<vmem>>) attributes {dimension_semantics = [#tpu.dimension_semantics<parallel>, #tpu.dimension_semantics<arbitrary>], iteration_bounds = array<i64: 1, 2>, scalar_prefetch = 0 : i64, scratch_operands = 1 : i64, tpu.core_type = #tpu.core_type<tc>, window_params = [{transform_indices = @transform_0, window_bounds = array<i64: 1, 4, 16>}, {transform_indices = @transform_1, window_bounds = array<i64: 4, 3>}, {transform_indices = @transform_2, window_bounds = array<i64: 1, 4, 12>}, {transform_indices = @transform_3, window_bounds = array<i64: 4, 2>}]} {
    %c0_i32 = arith.constant 0 : i32
    %0 = arith.cmpi eq, %arg1, %c0_i32 : i32
    %1 = arith.extui %0 : i1 to i32
    %c0_i32_0 = arith.constant 0 : i32
    %2 = arith.cmpi ne, %1, %c0_i32_0 : i32
    scf.if %2 {
      %cst_26 = arith.constant 0.000000e+00 : f32
      %39 = vector.broadcast %cst_26 : f32 to vector<4x2xf32>
      %c0_27 = arith.constant 0 : index
      %c0_28 = arith.constant 0 : index
      %40 = vector.load %arg6[%c0_27, %c0_28] : memref<4x2xf32, #tpu.memory_space<vmem>>, vector<4x2xf32>
      tpu.vector_store %arg6[%c0_27, %c0_28], %39 {strides = array<i32>} : memref<4x2xf32, #tpu.memory_space<vmem>>, vector<4x2xf32>,
    } else {
    }
    %cst = arith.constant 0.000000e+00 : f32
    %3 = vector.broadcast %cst : f32 to vector<1x4x12xf32>
    %c0 = arith.constant 0 : index
    %c0_1 = arith.constant 0 : index
    %c0_2 = arith.constant 0 : index
    %4 = vector.load %arg2[%c0, %c0_1, %c0_2] : memref<1x4x16xf32, #tpu.memory_space<vmem>>, vector<1x4x12xf32>
    %c0_3 = arith.constant 0 : index
    %c0_4 = arith.constant 0 : index
    %5 = vector.load %arg3[%c0_3, %c0_4] : memref<4x3xf32, #tpu.memory_space<vmem>>, vector<4x1xf32>
    %6 = vector.shape_cast %5 : vector<4x1xf32> to vector<1x4x1xf32>
    %7 = vector.broadcast %6 : vector<1x4x1xf32> to vector<1x4x12xf32>
    %8 = arith.mulf %4, %7 : vector<1x4x12xf32>
    %9 = arith.addf %3, %8 : vector<1x4x12xf32>
    %c0_5 = arith.constant 0 : index
    %c0_6 = arith.constant 0 : index
    %c2 = arith.constant 2 : index
    %10 = vector.load %arg2[%c0_5, %c0_6, %c2] : memref<1x4x16xf32, #tpu.memory_space<vmem>>, vector<1x4x12xf32>
    %c0_7 = arith.constant 0 : index
    %c1 = arith.constant 1 : index
    %11 = vector.load %arg3[%c0_7, %c1] : memref<4x3xf32, #tpu.memory_space<vmem>>, vector<4x1xf32>
    %12 = vector.shape_cast %11 : vector<4x1xf32> to vector<1x4x1xf32>
    %13 = vector.broadcast %12 : vector<1x4x1xf32> to vector<1x4x12xf32>
    %14 = arith.mulf %10, %13 : vector<1x4x12xf32>
    %15 = arith.addf %9, %14 : vector<1x4x12xf32>
    %c0_8 = arith.constant 0 : index
    %c0_9 = arith.constant 0 : index
    %c4 = arith.constant 4 : index
    %16 = vector.load %arg2[%c0_8, %c0_9, %c4] : memref<1x4x16xf32, #tpu.memory_space<vmem>>, vector<1x4x12xf32>
    %c0_10 = arith.constant 0 : index
    %c2_11 = arith.constant 2 : index
    %17 = vector.load %arg3[%c0_10, %c2_11] : memref<4x3xf32, #tpu.memory_space<vmem>>, vector<4x1xf32>
    %18 = vector.shape_cast %17 : vector<4x1xf32> to vector<1x4x1xf32>
    %19 = vector.broadcast %18 : vector<1x4x1xf32> to vector<1x4x12xf32>
    %20 = arith.mulf %16, %19 : vector<1x4x12xf32>
    %21 = arith.addf %15, %20 : vector<1x4x12xf32>
    %22 = arith.truncf %21 : vector<1x4x12xf32> to vector<1x4x12xbf16>
    %c0_12 = arith.constant 0 : index
    %c0_13 = arith.constant 0 : index
    %c0_14 = arith.constant 0 : index
    %23 = vector.load %arg4[%c0_12, %c0_13, %c0_14] : memref<1x4x12xbf16, #tpu.memory_space<vmem>>, vector<1x4x12xbf16>
    tpu.vector_store %arg4[%c0_12, %c0_13, %c0_14], %22 {strides = array<i32>} : memref<1x4x12xbf16, #tpu.memory_space<vmem>>, vector<1x4x12xbf16>,
    %24 = vector.shape_cast %21 : vector<1x4x12xf32> to vector<4x12xf32>
    %cst_15 = arith.constant dense<0.000000e+00> : vector<4xf32>
    %25 = vector.multi_reduction <add>, %24, %cst_15 [1] : vector<4x12xf32> to vector<4xf32>
    %26 = vector.shape_cast %25 : vector<4xf32> to vector<4x1xf32>
    %27 = arith.mulf %24, %24 : vector<4x12xf32>
    %cst_16 = arith.constant dense<0.000000e+00> : vector<4xf32>
    %28 = vector.multi_reduction <add>, %27, %cst_16 [1] : vector<4x12xf32> to vector<4xf32>
    %29 = vector.shape_cast %28 : vector<4xf32> to vector<4x1xf32>
    %c0_17 = arith.constant 0 : index
    %c0_18 = arith.constant 0 : index
    %30 = vector.load %arg6[%c0_17, %c0_18] : memref<4x2xf32, #tpu.memory_space<vmem>>, vector<4x1xf32>
    %31 = arith.addf %30, %26 : vector<4x1xf32>
    %c0_19 = arith.constant 0 : index
    %c0_20 = arith.constant 0 : index
    %32 = vector.load %arg6[%c0_19, %c0_20] : memref<4x2xf32, #tpu.memory_space<vmem>>, vector<4x1xf32>
    tpu.vector_store %arg6[%c0_19, %c0_20], %31 {strides = array<i32>} : memref<4x2xf32, #tpu.memory_space<vmem>>, vector<4x1xf32>,
    %c0_21 = arith.constant 0 : index
    %c1_22 = arith.constant 1 : index
    %33 = vector.load %arg6[%c0_21, %c1_22] : memref<4x2xf32, #tpu.memory_space<vmem>>, vector<4x1xf32>
    %34 = arith.addf %33, %29 : vector<4x1xf32>
    %c0_23 = arith.constant 0 : index
    %c1_24 = arith.constant 1 : index
    %35 = vector.load %arg6[%c0_23, %c1_24] : memref<4x2xf32, #tpu.memory_space<vmem>>, vector<4x1xf32>
    tpu.vector_store %arg6[%c0_23, %c1_24], %34 {strides = array<i32>} : memref<4x2xf32, #tpu.memory_space<vmem>>, vector<4x1xf32>,
    %c1_i32 = arith.constant 1 : i32
    %36 = arith.cmpi eq, %arg1, %c1_i32 : i32
    %37 = arith.extui %36 : i1 to i32
    %c0_i32_25 = arith.constant 0 : i32
    %38 = arith.cmpi ne, %37, %c0_i32_25 : i32
    scf.if %38 {
      %c0_26 = arith.constant 0 : index
      %c0_27 = arith.constant 0 : index
      %39 = vector.load %arg6[%c0_26, %c0_27] : memref<4x2xf32, #tpu.memory_space<vmem>>, vector<4x2xf32>
      %c0_28 = arith.constant 0 : index
      %c0_29 = arith.constant 0 : index
      %40 = vector.load %arg5[%c0_28, %c0_29] : memref<4x2xf32, #tpu.memory_space<vmem>>, vector<4x2xf32>
      tpu.vector_store %arg5[%c0_28, %c0_29], %39 {strides = array<i32>} : memref<4x2xf32, #tpu.memory_space<vmem>>, vector<4x2xf32>,
    } else {
    }
    return
  }
  func.func @transform_0(%arg0: i32, %arg1: i32) -> (i32, i32, i32) {
    %c0_i32 = arith.constant 0 : i32
    %c0_i32_0 = arith.constant 0 : i32
    return %arg1, %arg0, %c0_i32 : i32, i32, i32
  }
  func.func @transform_1(%arg0: i32, %arg1: i32) -> (i32, i32) {
    %c0_i32 = arith.constant 0 : i32
    %c0_i32_0 = arith.constant 0 : i32
    return %arg0, %c0_i32 : i32, i32
  }
  func.func @transform_2(%arg0: i32, %arg1: i32) -> (i32, i32, i32) {
    %c0_i32 = arith.constant 0 : i32
    %c0_i32_0 = arith.constant 0 : i32
    return %arg1, %arg0, %c0_i32 : i32, i32, i32
  }
  func.func @transform_3(%arg0: i32, %arg1: i32) -> (i32, i32) {
    %c0_i32 = arith.constant 0 : i32
    %c0_i32_0 = arith.constant 0 : i32
    return %arg0, %c0_i32 : i32, i32
  }
}

</mosaic_0001>

<llo_original>
// kernel: tpu_custom_call.1
$region0: #{tpu_custom_call.1}
  #allocation0 [shape = 'u32[]', space=smem, size = 0x4, offset = 0x4, fixed_abs, tag = 'smem constant byte address 0x4 - core index']
  #allocation1 [shape = 'u32[72,128]{1,0:T(1,128)}', space=vmem, size = 0x9000, scoped, tag = 'internal scratch']
  #allocation2 [shape = 'f32[4,2]{1,0:T(4,128)}', space=vmem, size = 0x800, scoped, tag = 'scratch operand']
  %s0 = inlined_call_operand.hbm [shape: f32[2,4,16], index: 0, kind: input, shape index: {}]
  %s1 = inlined_call_operand.hbm [shape: f32[4,3], index: 1, kind: input, shape index: {}]
  %s2 = inlined_call_operand.hbm [shape: bf16[2,4,12], index: 2, kind: output, shape index: {0}]
  %s3 = inlined_call_operand.vmem [shape: f32[4,2], index: 3, kind: output, shape index: {1}]
  %4 = xla_tuple %s2, %s3
  %s5 = sld [smem:[#allocation0]]
  $region65: #{tpu_custom_call.1} parent=0
    _
  %s7 = ssub.s32 1, %s5
  %s8 = scalar_select 0, %s7, %s5
  $region1: #{tpu_custom_call.1} parent=0
    #allocation3 [shape = 'u8[4096]{0}', space=vmem, size = 0x1000, scoped, tag = 'input window, operand 0']
    #allocation4 [shape = 's32[2]{0}', space=sflag, size = 0x8, scoped, tag = 'scoped memory for tpu_custom_call.1']
    #allocation5 [shape = 's32[2]{0}', space=sflag, size = 0x8, scoped, tag = 'scoped memory for tpu_custom_call.1']
    #allocation6 [shape = 'u8[2048]{0}', space=vmem, size = 0x800, scoped, tag = 'input window, operand 1, single buffered']
    #allocation7 [shape = 's32[1]{0}', space=sflag, size = 0x4, scoped, tag = 'scoped memory for tpu_custom_call.1']
    #allocation8 [shape = 'u8[2048]{0}', space=vmem, size = 0x800, scoped, tag = 'output window, operand 0']
    %9 = vsyncpa [#allocation4], 0
    %s10 = scalar_lea.sflag [#allocation4], 1
    %11 = vsyncpa %s10, 0
    %12 = vsyncpa [#allocation7], 0
    %13 = vsyncpa [#allocation5], 0
    %s14 = scalar_lea.sflag [#allocation5], 1
    %15 = vsyncpa %s14, 0
    loop: start=0, step=1, limit=4
    $region2: #{tpu_custom_call.1} parent=1 // loop_pre_header
      _
    $region3: #{tpu_custom_call.1} parent=1 // loop_header
      %s17 = sphi 0, %s21
      %p18 = scmp.ge.s32.totalorder %s17, 4
      %s24 = sphi 0, %s36
      %s25 = sphi 0, %s32
      %s26 = sphi 0, %s24
      %s27 = sphi 0, %s25
      %s28 = sphi 0, %s26
      %s29 = sphi 0, %s27
      %s41 = sphi 0, %s43
      %s44 = sphi 0, %s41
      %s45 = sphi 0, %s44
      %s61 = sphi 0, %s45
      %s67 = sphi 0, %s69
      %s70 = sphi 0, %s67
      %s71 = sphi 0, %s70
      %s87 = sphi 0, %s71
      %s95 = sphi 0, %s97
      %s98 = sphi 0, %s95
      %s99 = sphi 0, %s98
      %s115 = sphi 0, %s99
      %s121 = sphi 0, %s123
      %s124 = sphi 0, %s121
      %s125 = sphi 0, %s124
      %s141 = sphi 0, %s125
    $region4: #{tpu_custom_call.1} parent=1 // loop_header_branch
      %20 = sbr.rel (%p18) target = $region8
    $region5: #{tpu_custom_call.1} parent=1 // loop_body
      %s22 = ssub.s32 %s17, 1
      %s23 = ssub.s32 %s17, 2
      %s30 = sadd.s32 1, %s25
      %p31 = scmp.ge.s32.totalorder %s30, 2
      %s32 = scalar_select %p31, 0, %s30
      %s33 = sadd.s32 1, %s24
      %s34 = scalar_select %p31, %s33, %s24
      %p35 = scmp.ge.s32.totalorder %s34, 1
      %s36 = scalar_select %p35, 0, %s34
      %s37 = ssub.s32 %s25, %s32
      %s38 = ssub.s32 %s24, %s36
      %s39 = sor.u32 %s37, %s38
      %p40 = scmp.eq.s32.totalorder %s39, 0
      %s42 = sadd.s32 %s41, 1
      %s43 = scalar_select %p40, %s41, %s42
      %p46 = pneg %p40
      %p47 = scmp.eq.s32.totalorder %s17, 1
      %p48 = por %p46, %p47
      %p49 = scmp.ne.s32.totalorder %s41, %s44
      %p50 = scmp.eq.s32.totalorder %s17, 0
      %p51 = por %p49, %p50
      %p52 = scmp.ne.s32.totalorder %s41, %s44
      %p53 = scmp.eq.s32.totalorder %s22, 1
      %p54 = por %p52, %p53
      %p55 = scmp.ne.s32.totalorder %s44, %s45
      %p56 = scmp.eq.s32.totalorder %s22, 0
      %p57 = por %p55, %p56
      %p58 = scmp.ne.s32.totalorder %s44, %s45
      %p59 = scmp.eq.s32.totalorder %s23, 1
      %p60 = por %p58, %p59
      %p62 = scmp.ne.s32.totalorder %s45, %s61
      %p63 = scmp.eq.s32.totalorder %s23, 0
      %p64 = por %p62, %p63
      %s65 = ssub.s32 %s24, %s36
      %p66 = scmp.eq.s32.totalorder %s65, 0
      %s68 = sadd.s32 %s67, 1
      %s69 = scalar_select %p66, %s67, %s68
      %p72 = pneg %p66
      %p73 = scmp.eq.s32.totalorder %s17, 1
      %p74 = por %p72, %p73
      %p75 = scmp.ne.s32.totalorder %s67, %s70
      %p76 = scmp.eq.s32.totalorder %s17, 0
      %p77 = por %p75, %p76
      %p78 = scmp.ne.s32.totalorder %s67, %s70
      %p79 = scmp.eq.s32.totalorder %s22, 1
      %p80 = por %p78, %p79
      %p81 = scmp.ne.s32.totalorder %s70, %s71
      %p82 = scmp.eq.s32.totalorder %s22, 0
      %p83 = por %p81, %p82
      %p84 = scmp.ne.s32.totalorder %s70, %s71
      %p85 = scmp.eq.s32.totalorder %s23, 1
      %p86 = por %p84, %p85
      %p88 = scmp.ne.s32.totalorder %s71, %s87
      %p89 = scmp.eq.s32.totalorder %s23, 0
      %p90 = por %p88, %p89
      %s91 = ssub.s32 %s25, %s32
      %s92 = ssub.s32 %s24, %s36
      %s93 = sor.u32 %s91, %s92
      %p94 = scmp.eq.s32.totalorder %s93, 0
      %s96 = sadd.s32 %s95, 1
      %s97 = scalar_select %p94, %s95, %s96
      %p100 = pneg %p94
      %p101 = scmp.eq.s32.totalorder %s17, 1
      %p102 = por %p100, %p101
      %p103 = scmp.ne.s32.totalorder %s95, %s98
      %p104 = scmp.eq.s32.totalorder %s17, 0
      %p105 = por %p103, %p104
      %p106 = scmp.ne.s32.totalorder %s95, %s98
      %p107 = scmp.eq.s32.totalorder %s22, 1
      %p108 = por %p106, %p107
      %p109 = scmp.ne.s32.totalorder %s98, %s99
      %p110 = scmp.eq.s32.totalorder %s22, 0
      %p111 = por %p109, %p110
      %p112 = scmp.ne.s32.totalorder %s98, %s99
      %p113 = scmp.eq.s32.totalorder %s23, 1
      %p114 = por %p112, %p113
      %p116 = scmp.ne.s32.totalorder %s99, %s115
      %p117 = scmp.eq.s32.totalorder %s23, 0
      %p118 = por %p116, %p117
      %s119 = ssub.s32 %s24, %s36
      %p120 = scmp.eq.s32.totalorder %s119, 0
      %s122 = sadd.s32 %s121, 1
      %s123 = scalar_select %p120, %s121, %s122
      %p126 = pneg %p120
      %p127 = scmp.eq.s32.totalorder %s17, 1
      %p128 = por %p126, %p127
      %p129 = scmp.ne.s32.totalorder %s121, %s124
      %p130 = scmp.eq.s32.totalorder %s17, 0
      %p131 = por %p129, %p130
      %p132 = scmp.ne.s32.totalorder %s121, %s124
      %p133 = scmp.eq.s32.totalorder %s22, 1
      %p134 = por %p132, %p133
      %p135 = scmp.ne.s32.totalorder %s124, %s125
      %p136 = scmp.eq.s32.totalorder %s22, 0
      %p137 = por %p135, %p136
      %p138 = scmp.ne.s32.totalorder %s124, %s125
      %p139 = scmp.eq.s32.totalorder %s23, 1
      %p140 = por %p138, %p139
      %p142 = scmp.ne.s32.totalorder %s125, %s141
      %p143 = scmp.eq.s32.totalorder %s23, 0
      %p144 = por %p142, %p143
      %p145 = scmp.le.s32.totalorder 1, %s17
      %p146 = scmp.lt.s32.totalorder %s17, 3
      %p147 = pnand %p145, %p146
      %p148 = pneg %p147
      // Predicated region
      $region9: #{tpu_custom_call.1} parent=5 // pred_check
        _
      $region10: #{tpu_custom_call.1} parent=5 // pred_check_branch
        %150 = sbr.rel (%p147) target = $region12
      $region11: #{tpu_custom_call.1} parent=5 // pred_region
        %s151 = ssub.s32 %s17, 1
        // Predicated region
        $region13: #{tpu_custom_call.1} parent=11 // pred_check
          %p152 = pneg %p83
        $region14: #{tpu_custom_call.1} parent=11 // pred_check_branch
          %154 = sbr.rel (%p152) target = $region16
        $region15: #{tpu_custom_call.1} parent=11 // pred_region
          %156 = vsyncadd [#allocation7], 0
          %s157 = smul.addr %s26, 4
          %s158 = scalar_lea.hbm %s1, %s157
          %s160 = sshll.u32 %s158, 4
          %s161 = int_to_ptr.hbm [resolvable:$true] %s160
          %s162 = sshll.u32 [#allocation6], 4
          %s163 = int_to_ptr.vmem [resolvable:$true] %s162
          %165 = dma.hbm_to_vmem [thread:$0]  %s161, 64, %s163, [#allocation7]
        $region16: #{tpu_custom_call.1} parent=11 // pred_fallthru
          _
      $region12: #{tpu_custom_call.1} parent=5 // pred_fallthru
        _
      %p166 = scmp.lt.s32.totalorder %s17, 2
      // Predicated region
      $region17: #{tpu_custom_call.1} parent=5 // pred_check
        %p167 = pneg %p166
      $region18: #{tpu_custom_call.1} parent=5 // pred_check_branch
        %169 = sbr.rel (%p167) target = $region20
      $region19: #{tpu_custom_call.1} parent=5 // pred_region
        // Predicated region
        $region21: #{tpu_custom_call.1} parent=19 // pred_check
          %p170 = pneg %p51
        $region22: #{tpu_custom_call.1} parent=19 // pred_check_branch
          %172 = sbr.rel (%p170) target = $region24
        $region23: #{tpu_custom_call.1} parent=19 // pred_region
          %s173 = sand.u32 %s41, 1
          %s174 = scalar_lea.sflag [#allocation4], %s173
          %s175 = sand.u32 %s41, 1
          %s176 = smul.addr %s175, 4
          %s177 = scalar_lea.vmem [#allocation3], %s176
          %179 = vsyncadd %s174, 0
          %s180 = sadd.s32 %s24, %s25
          %s181 = smul.addr %s180, 4
          %s182 = scalar_lea.hbm %s0, %s181
          %s184 = sshll.u32 %s182, 4
          %s185 = int_to_ptr.hbm [resolvable:$true] %s184
          %s186 = sshll.u32 %s177, 4
          %s187 = int_to_ptr.vmem [resolvable:$true] %s186
          %189 = dma.hbm_to_vmem [thread:$0]  %s185, 64, %s187, %s174
        $region24: #{tpu_custom_call.1} parent=19 // pred_fallthru
          _
      $region20: #{tpu_custom_call.1} parent=5 // pred_fallthru
        _
      %p190 = scmp.le.s32.totalorder 1, %s17
      %p191 = scmp.lt.s32.totalorder %s17, 3
      %p192 = pnand %p190, %p191
      %p193 = pneg %p192
      // Predicated region
      $region25: #{tpu_custom_call.1} parent=5 // pred_check
        _
      $region26: #{tpu_custom_call.1} parent=5 // pred_check_branch
        %195 = sbr.rel (%p192) target = $region28
      $region27: #{tpu_custom_call.1} parent=5 // pred_region
        %s196 = ssub.s32 %s17, 1
        %s197 = sand.u32 %s44, 1
        %s198 = scalar_lea.sflag [#allocation4], %s197
        %s199 = sand.u32 %s44, 1
        %s200 = smul.addr %s199, 4
        %s201 = scalar_lea.vmem [#allocation3], %s200
        // Predicated region
        $region29: #{tpu_custom_call.1} parent=27 // pred_check
          %p202 = pneg %p57
        $region30: #{tpu_custom_call.1} parent=27 // pred_check_branch
          %204 = sbr.rel (%p202) target = $region32
        $region31: #{tpu_custom_call.1} parent=27 // pred_region
          %206 = dma.done %s198, 64
        $region32: #{tpu_custom_call.1} parent=27 // pred_fallthru
          _
        // Predicated region
        $region33: #{tpu_custom_call.1} parent=27 // pred_check
          %p207 = pneg %p83
        $region34: #{tpu_custom_call.1} parent=27 // pred_check_branch
          %209 = sbr.rel (%p207) target = $region36
        $region35: #{tpu_custom_call.1} parent=27 // pred_region
          %211 = dma.done [#allocation7], 64
        $region36: #{tpu_custom_call.1} parent=27 // pred_fallthru
          _
        %s212 = sand.u32 %s44, 1
        %s213 = scalar_lea.sflag [#allocation4], %s212
        %s214 = sand.u32 %s44, 1
        %s215 = smul.addr %s214, 4
        %s216 = scalar_lea.vmem [#allocation3], %s215
        %p217 = pneg %p57
        %p218 = pneg %p54
        %p219 = pneg %p83
        %p220 = pneg %p80
        %p221 = pneg %p111
        %p222 = pneg %p108
        %s223 = sand.u32 %s98, 1
        %s224 = scalar_lea.sflag [#allocation5], %s223
        %s225 = sand.u32 %s98, 1
        %s226 = smul.addr %s225, 2
        %s227 = scalar_lea.vmem [#allocation8], %s226
        %p228 = pneg %p137
        %p229 = pneg %p134
        %p230 = scmp.lt.s32.totalorder %s26, 0
        %s231 = scalar_select %p230, %s26, 0
        %s232 = smul.addr %s231, 4
        %s233 = scalar_lea.vmem %s3, %s232
        %p234 = scmp.lt.s32.totalorder %s26, 0
        %s235 = scalar_select %p234, %s26, 0
        %s236 = smul.addr %s235, 4
        %s237 = scalar_lea.vmem %s3, %s236
        %p238 = scmp.eq.s32.totalorder %s27, 0
        // Predicated region
        $region37: #{tpu_custom_call.1} parent=27 // pred_check
          %p239 = pneg %p238
        $region38: #{tpu_custom_call.1} parent=27 // pred_check_branch
          %241 = sbr.rel (%p239) target = $region40
        $region39: #{tpu_custom_call.1} parent=27 // pred_region
          %vm242 = vcmask 11264
          %243 = vst.msk [vmem:[#allocation2] sm:$0xf] %vm242, 0.0
        $region40: #{tpu_custom_call.1} parent=27 // pred_fallthru
          _
        %v244 = vld [vmem:[%s201] sm:$0xf]
        %v245 = vld [vmem:[#allocation6] sm:$0xf]
        %247 = vset.pattern.permute.xlu0 0
        %248 = vperm.xlu0 %247, %v245
        %v249 = vpop.permute.xlu0 %248
        %v251 = vmul.f32 %v244, %v249
        %v252 = vadd.f32 %v251, 0.0
        %253 = vset.pattern.permute.xlu0 1
        %254 = vperm.xlu0 %253, %v245
        %v255 = vpop.permute.xlu0 %254
        %v257 = vmul.f32 %v244, %v255
        %259 = vrot.lane.b32.xlu0 %v257, 126
        %v260 = vpop.permute.xlu0 %259
        %v262 = vadd.f32 %v252, %v260
        %263 = vset.pattern.permute.xlu0 2
        %264 = vperm.xlu0 %263, %v245
        %v265 = vpop.permute.xlu0 %264
        %v267 = vmul.f32 %v244, %v265
        %269 = vrot.lane.b32.xlu0 %v267, 124
        %v270 = vpop.permute.xlu0 %269
        %v272 = vadd.f32 %v262, %v270
        %v273 = vpack.c.bf16 %v272, %v272
        %vm274 = vcmask 91136
        %275 = vst.msk [vmem:[%s227] sm:$0x3] %vm274, %v273
        %vm276 = vcmask 93184
        %v277 = vsel %vm276, %v272, 0.0
        %278 = vadd.xlane.f32.xlu0 %v277
        %v279 = vpop.xlane.xlu0 %278
        %v280 = vmul.f32 %v272, %v272
        %v281 = vsel %vm276, %v280, 0.0
        %282 = vadd.xlane.f32.xlu0 %v281
        %v283 = vpop.xlane.xlu0 %282
        %v284 = vld [vmem:[#allocation2] sm:$0xf]
        %v285 = vadd.f32 %v284, %v279
        %vm286 = vcmask 3072
        %287 = vst.msk [vmem:[#allocation2] sm:$0xf] %vm286, %v285
        %v288 = vld [vmem:[#allocation2] sm:$0xf]
        %v289 = vadd.f32 %v288, %v283
        %vm290 = vcmask 11272
        %291 = vst.msk [vmem:[#allocation2] sm:$0xf] %vm290, %v289
        %p292 = scmp.eq.s32.totalorder %s27, 1
        // Predicated region
        $region41: #{tpu_custom_call.1} parent=27 // pred_check
          %p293 = pneg %p292
        $region42: #{tpu_custom_call.1} parent=27 // pred_check_branch
          %295 = sbr.rel (%p293) target = $region44
        $region43: #{tpu_custom_call.1} parent=27 // pred_region
          %v296 = vld [vmem:[#allocation2] sm:$0xf]
          %vm297 = vcmask 11264
          %298 = vst.msk [vmem:[%s237] sm:$0xf] %vm297, %v296
        $region44: #{tpu_custom_call.1} parent=27 // pred_fallthru
          _
        %s299 = sand.u32 %s98, 1
        %s300 = scalar_lea.sflag [#allocation5], %s299
        %s301 = sand.u32 %s98, 1
        %s302 = smul.addr %s301, 2
        %s303 = scalar_lea.vmem [#allocation8], %s302
        %p304 = scmp.lt.s32.totalorder %s26, 0
        %s305 = scalar_select %p304, %s26, 0
        %s306 = smul.addr %s305, 4
        %s307 = scalar_lea.vmem %s3, %s306
        // Predicated region
        $region45: #{tpu_custom_call.1} parent=27 // pred_check
          %p308 = pneg %p108
        $region46: #{tpu_custom_call.1} parent=27 // pred_check_branch
          %310 = sbr.rel (%p308) target = $region48
        $region47: #{tpu_custom_call.1} parent=27 // pred_region
          %312 = vsyncadd %s300, 0
          %s313 = sadd.s32 %s26, %s27
          %s314 = smul.addr %s313, 2
          %s315 = scalar_lea.hbm %s2, %s314
          %s317 = sshll.u32 %s303, 4
          %s318 = int_to_ptr.vmem [resolvable:$true] %s317
          %s319 = sshll.u32 %s315, 4
          %s320 = int_to_ptr.hbm [resolvable:$true] %s319
          %322 = dma.vmem_to_hbm [thread:$0]  %s318, 32, %s320, %s300
        $region48: #{tpu_custom_call.1} parent=27 // pred_fallthru
          _
        // Predicated region
        $region49: #{tpu_custom_call.1} parent=27 // pred_check
          %p323 = pneg %p134
        $region50: #{tpu_custom_call.1} parent=27 // pred_check_branch
          %325 = sbr.rel (%p323) target = $region52
        $region51: #{tpu_custom_call.1} parent=27 // pred_region
          _
        $region52: #{tpu_custom_call.1} parent=27 // pred_fallthru
          _
        // Predicated region
        $region53: #{tpu_custom_call.1} parent=27 // pred_check
          %p326 = pneg %p134
        $region54: #{tpu_custom_call.1} parent=27 // pred_check_branch
          %328 = sbr.rel (%p326) target = $region56
        $region55: #{tpu_custom_call.1} parent=27 // pred_region
          %p329 = scmp.lt.s32.totalorder %s26, 0
          %s330 = scalar_select %p329, %s26, 0
          %s331 = smul.addr %s330, 4
          %s332 = scalar_lea.vmem %s3, %s331
        $region56: #{tpu_custom_call.1} parent=27 // pred_fallthru
          _
      $region28: #{tpu_custom_call.1} parent=5 // pred_fallthru
        _
      %p333 = scmp.le.s32.totalorder 2, %s17
      // Predicated region
      $region57: #{tpu_custom_call.1} parent=5 // pred_check
        %p334 = pneg %p333
      $region58: #{tpu_custom_call.1} parent=5 // pred_check_branch
        %336 = sbr.rel (%p334) target = $region60
      $region59: #{tpu_custom_call.1} parent=5 // pred_region
        %s337 = ssub.s32 %s17, 2
        // Predicated region
        $region61: #{tpu_custom_call.1} parent=59 // pred_check
          %p338 = pneg %p114
        $region62: #{tpu_custom_call.1} parent=59 // pred_check_branch
          %340 = sbr.rel (%p338) target = $region64
        $region63: #{tpu_custom_call.1} parent=59 // pred_region
          %s341 = sand.u32 %s99, 1
          %s342 = scalar_lea.sflag [#allocation5], %s341
          %s343 = sand.u32 %s99, 1
          %s344 = smul.addr %s343, 2
          %s345 = scalar_lea.vmem [#allocation8], %s344
          %347 = dma.done %s342, 32
        $region64: #{tpu_custom_call.1} parent=59 // pred_fallthru
          _
      $region60: #{tpu_custom_call.1} parent=5 // pred_fallthru
        _
    $region6: #{tpu_custom_call.1} parent=1 // loop_footer
      %s21 = sadd.s32 1, %s17
    $region7: #{tpu_custom_call.1} parent=1 // loop_footer_branch
      %16 = sbr.rel target = $region3
    $region8: #{tpu_custom_call.1} parent=1 // loop_exit
      _
    %348 = vsyncpa [#allocation4], 1
    %s349 = scalar_lea.sflag [#allocation4], 1
    %350 = vsyncpa %s349, 1
    %351 = vsyncpa [#allocation7], 1
    %352 = vsyncpa [#allocation5], 1
    %s353 = scalar_lea.sflag [#allocation5], 1
    %354 = vsyncpa %s353, 1

</llo_original>
